<compile_context>
chip_gen: v5e
topology: v5e:2x2
jax: 0.10.0
libtpu: 0.0.40
codegen_flags: <defaults>
</compile_context>

<pallas_src>
import functools
import math

import numpy as np
import jax
import jax.numpy as jnp
from jax.experimental import pallas as pl
from jax.experimental.pallas import tpu as pltpu

NUM_HEADS = 4  # TODO(synk): head count of TransformerLayers_vanilla not given; STEP uses 4.

_LAYER_PARAM_ORDER = ('in_w', 'in_b', 'out_w', 'out_b', 'ln1_g', 'ln1_b',
                      'ff1_w', 'ff1_b', 'ff2_w', 'ff2_b', 'ln2_g', 'ln2_b')


# ----------------------------------------------------------------------------
# Generic grouped linear kernel (patch embedding, embed_out)
# ----------------------------------------------------------------------------
def _grouped_linear_kernel(x_ref, w_ref, b_ref, o_ref, *, relu):
    # x_ref: (1, tm, K) bf16, w_ref: (1, K, N) bf16, b_ref: (1, 1, N) f32
    y = jnp.dot(x_ref[0], w_ref[0], preferred_element_type=jnp.float32) + b_ref[0]
    if relu:
        y = jnp.maximum(y, 0.0)
    o_ref[0] = y.astype(o_ref.dtype)


def _choose_tile(m, k, n, max_tile=512, budget_bytes=8 << 20):
    """Largest row-tile (multiple of 8) dividing m whose block fits a VMEM budget."""
    def fits(tm):
        # bf16 operands, double-buffered inputs + output.
        return 2 * 2 * (tm * k + k * n + tm * n) <= budget_bytes
    if m <= max_tile and fits(m):
        return m
    start = min(max_tile, m)
    start -= start % 8
    for tm in range(start, 7, -8):
        if m % tm == 0 and fits(tm):
            return tm
    return m  # fallback (shapes in this model are tiny, always fits)


def grouped_linear(x, w, b, relu=False, out_dtype=jnp.float32, max_tile=512):
    """y[g] = x[g] @ w[g] + b[g]  (x: (G,M,K), w: (G,K,N), b: (G,N))."""
    G, M, K = x.shape
    N = w.shape[-1]
    tm = _choose_tile(M, K, N, max_tile)
    b2 = b.reshape(G, 1, N).astype(jnp.float32)
    # TODO(synk): if outputs with last dim < 128 ever become large, restack them
    # lane-dense before the out_spec (masked partial-store penalty on v6e).
    return pl.pallas_call(
        functools.partial(_grouped_linear_kernel, relu=relu),
        grid=(G, M // tm),
        in_specs=[
            pl.BlockSpec((1, tm, K), lambda g, m: (g, m, 0)),
            pl.BlockSpec((1, K, N), lambda g, m: (g, 0, 0)),
            pl.BlockSpec((1, 1, N), lambda g, m: (g, 0, 0)),
        ],
        out_specs=pl.BlockSpec((1, tm, N), lambda g, m: (g, m, 0)),
        out_shape=jax.ShapeDtypeStruct((G, M, N), out_dtype),
        compiler_params=pltpu.CompilerParams(
            dimension_semantics=("parallel", "parallel")),
    )(x.astype(jnp.bfloat16), w.astype(jnp.bfloat16), b2)


# ----------------------------------------------------------------------------
# Fused transformer-stack kernels
# ----------------------------------------------------------------------------
def _layer_norm(t, g, b, eps=1e-5):
    mu = jnp.mean(t, axis=-1, keepdims=True)
    tc = t - mu
    var = jnp.mean(tc * tc, axis=-1, keepdims=True)
    return tc * jax.lax.rsqrt(var + eps) * g + b


def _transformer_layer(x, refs, l, same_seq, *, num_heads):
    """One post-norm encoder layer on a flat (R, D) slab of stacked sequences.

    `same_seq` is the (R, R) block-diagonal mask keeping attention within each
    length-L sequence.  Weights are indexed with the static layer index `l`.
    """
    (in_w, in_b, out_w, out_b, ln1g, ln1b,
     ff1w, ff1b, ff2w, ff2b, ln2g, ln2b) = refs
    R, D = x.shape
    Dh = D // num_heads
    att_scale = 1.0 / math.sqrt(Dh)

    x_bf = x.astype(jnp.bfloat16)

    # --- QKV projection: one (R, D) @ (D, 3D) bf16 MXU matmul, fp32 acc ---
    qkv = jnp.dot(x_bf, in_w[0, l], preferred_element_type=jnp.float32) + in_b[0, l]
    q = (qkv[:, 0:D] * att_scale).astype(jnp.bfloat16)     # fold 1/sqrt(Dh) into Q
    k = qkv[:, D:2 * D].astype(jnp.bfloat16)
    v = qkv[:, 2 * D:3 * D].astype(jnp.bfloat16)

    # --- attention: per-head, all sequences at once, block-diag masked ---
    heads = []
    for h in range(num_heads):
        cols = slice(h * Dh, (h + 1) * Dh)
        s = jax.lax.dot_general(q[:, cols], k[:, cols],
                                (((1,), (1,)), ((), ())),
                                preferred_element_type=jnp.float32)     # (R, R)
        s = jnp.where(same_seq, s, -1e30)
        s = s - jnp.max(s, axis=-1, keepdims=True)
        p = jnp.exp(s)
        p = p * pl.reciprocal(jnp.sum(p, axis=-1, keepdims=True), approx=True)
        heads.append(jnp.dot(p.astype(jnp.bfloat16), v[:, cols],
                             preferred_element_type=jnp.float32))        # (R, Dh)
    heads_all = jnp.concatenate(heads, axis=-1).astype(jnp.bfloat16)     # (R, D)

    # --- single K=128 output projection for all heads / all sequences ---
    attn = jnp.dot(heads_all, out_w[0, l],
                   preferred_element_type=jnp.float32) + out_b[0, l]

    # --- residual + LN1 (fp32) ---
    y = _layer_norm(x + attn, ln1g[0, l], ln1b[0, l])

    # --- FFN (bf16 MXU, fp32 acc) ---
    f1 = jnp.maximum(jnp.dot(y.astype(jnp.bfloat16), ff1w[0, l],
                             preferred_element_type=jnp.float32) + ff1b[0, l], 0.0)
    f2 = jnp.dot(f1.astype(jnp.bfloat16), ff2w[0, l],
                 preferred_element_type=jnp.float32) + ff2b[0, l]

    # --- residual + LN2 (fp32) ---
    return _layer_norm(y + f2, ln2g[0, l], ln2b[0, l])


def _seq_mask(rows, seq_len):
    r = jax.lax.broadcasted_iota(jnp.int32, (rows, rows), 0) // seq_len
    c = jax.lax.broadcasted_iota(jnp.int32, (rows, rows), 1) // seq_len
    return r == c


def _encoder_stack_kernel(x_ref,
                          in_w, in_b, out_w, out_b, ln1g, ln1b,
                          ff1w, ff1b, ff2w, ff2b, ln2g, ln2b,
                          e2d_w, e2d_b,
                          o_ref, *, num_layers, num_heads, seq_len, pre_scale):
    """Both encoder layers + encoder_2_decoder fused.  x_ref: (1, R, D)."""
    x = x_ref[0].astype(jnp.float32) * pre_scale          # sqrt(d_model) folded in
    R = x.shape[0]
    same_seq = _seq_mask(R, seq_len)
    refs = (in_w, in_b, out_w, out_b, ln1g, ln1b,
            ff1w, ff1b, ff2w, ff2b, ln2g, ln2b)
    for l in range(num_layers):
        x = _transformer_layer(x, refs, l, same_seq, num_heads=num_heads)
    # encoder_2_decoder epilogue (per-group D x D linear)
    h = jnp.dot(x.astype(jnp.bfloat16), e2d_w[0],
                preferred_element_type=jnp.float32) + e2d_b[0]
    o_ref[0] = h.astype(o_ref.dtype)


def _decoder_stack_kernel(x_ref,
                          in_w, in_b, out_w, out_b, ln1g, ln1b,
                          ff1w, ff1b, ff2w, ff2b, ln2g, ln2b,
                          outp_w, outp_b,
                          h_ref, y_ref, *, num_layers, num_heads, seq_len, pre_scale):
    """Both (shared-weight) decoder layers + per-modality output_layer fused."""
    x = x_ref[0].astype(jnp.float32) * pre_scale
    R = x.shape[0]
    same_seq = _seq_mask(R, seq_len)
    refs = (in_w, in_b, out_w, out_b, ln1g, ln1b,
            ff1w, ff1b, ff2w, ff2b, ln2g, ln2b)
    for l in range(num_layers):
        x = _transformer_layer(x, refs, l, same_seq, num_heads=num_heads)
    h_ref[0] = x.astype(h_ref.dtype)                      # decoder hidden (for embed_out)
    yo = jnp.dot(x.astype(jnp.bfloat16), outp_w[0],
                 preferred_element_type=jnp.float32) + outp_b[0]
    y_ref[0] = yo.astype(y_ref.dtype)                     # output_layer result (P wide)


# ----------------------------------------------------------------------------
# Wrappers
# ----------------------------------------------------------------------------
def _stack_layer_params(stacks):
    """stacks: list (per group) of layer-lists -> dict of (G, n_layers, ...) arrays."""
    G, nl = len(stacks), len(stacks[0])
    out = {}
    for key in _LAYER_PARAM_ORDER:
        a = jnp.stack([jnp.stack([stacks[g][l][key] for l in range(nl)], axis=0)
                       for g in range(G)], axis=0)
        if key.endswith('_w'):
            out[key] = a.astype(jnp.bfloat16)                       # (G, nl, K, N)
        else:
            out[key] = a.reshape(G, nl, 1, a.shape[-1]).astype(jnp.float32)
    return out


def _mg_split(mg):
    """Split the sequence axis into 2 tiles when possible (even v7x TC split)."""
    return (mg // 2, 2) if (mg % 2 == 0 and mg >= 2) else (mg, 1)


def fused_encoder(x, layers, e2d_w, e2d_b, out_dtype=jnp.bfloat16):
    """x: (G, Mg, L, D).  layers: (G, nl, ...) param dict.  e2d: per-group (G,D,D)/(G,D)."""
    G, Mg, L, D = x.shape
    nl = layers['in_w'].shape[1]
    mg_tile, n_mg = _mg_split(Mg)
    R_tile = mg_tile * L
    x_flat = x.reshape(G, Mg * L, D).astype(jnp.bfloat16)

    def group_spec(a):
        nd = a.ndim
        return pl.BlockSpec((1,) + a.shape[1:],
                            lambda mg, g, _n=nd: (g,) + (0,) * (_n - 1))

    in_specs = [pl.BlockSpec((1, R_tile, D), lambda mg, g: (g, mg, 0))]
    args = [x_flat]
    for key in _LAYER_PARAM_ORDER:
        a = layers[key]
        in_specs.append(group_spec(a))
        args.append(a)
    e2d_w_ = e2d_w.astype(jnp.bfloat16)                   # (G, D, D)
    e2d_b_ = e2d_b.reshape(G, 1, D).astype(jnp.float32)
    in_specs += [group_spec(e2d_w_), group_spec(e2d_b_)]
    args += [e2d_w_, e2d_b_]

    out = pl.pallas_call(
        functools.partial(_encoder_stack_kernel, num_layers=nl, num_heads=NUM_HEADS,
                          seq_len=L, pre_scale=math.sqrt(D)),
        grid=(n_mg, G),
        in_specs=in_specs,
        out_specs=pl.BlockSpec((1, R_tile, D), lambda mg, g: (g, mg, 0)),
        out_shape=jax.ShapeDtypeStruct((G, Mg * L, D), out_dtype),
        compiler_params=pltpu.CompilerParams(
            dimension_semantics=("parallel", "parallel")),
    )(*args)
    return out.reshape(G, Mg, L, D)


def fused_decoder(x, layers, outp_w, outp_b):
    """x: (G, Mg, L, D).  layers have a group axis of 1 (shared weights).
    outp_*: per-group output_layer weights (G, D, P)/(G, P).
    Returns (H (G,Mg,L,D) f32, out_full (G,Mg,L,P) f32)."""
    G, Mg, L, D = x.shape
    P = outp_w.shape[-1]
    nl = layers['in_w'].shape[1]
    mg_tile, n_mg = _mg_split(Mg)
    R_tile = mg_tile * L
    x_flat = x.reshape(G, Mg * L, D).astype(jnp.bfloat16)

    def shared_spec(a):
        nd = a.ndim
        return pl.BlockSpec((1,) + a.shape[1:], lambda mg, g, _n=nd: (0,) * _n)

    def group_spec(a):
        nd = a.ndim
        return pl.BlockSpec((1,) + a.shape[1:],
                            lambda mg, g, _n=nd: (g,) + (0,) * (_n - 1))

    in_specs = [pl.BlockSpec((1, R_tile, D), lambda mg, g: (g, mg, 0))]
    args = [x_flat]
    for key in _LAYER_PARAM_ORDER:
        a = layers[key]
        in_specs.append(shared_spec(a))
        args.append(a)
    outp_w_ = outp_w.astype(jnp.bfloat16)                 # (G, D, P)
    outp_b_ = outp_b.reshape(G, 1, P).astype(jnp.float32)
    in_specs += [group_spec(outp_w_), group_spec(outp_b_)]
    args += [outp_w_, outp_b_]

    h, y = pl.pallas_call(
        functools.partial(_decoder_stack_kernel, num_layers=nl, num_heads=NUM_HEADS,
                          seq_len=L, pre_scale=math.sqrt(D)),
        grid=(n_mg, G),
        in_specs=in_specs,
        out_specs=(pl.BlockSpec((1, R_tile, D), lambda mg, g: (g, mg, 0)),
                   pl.BlockSpec((1, R_tile, P), lambda mg, g: (g, mg, 0))),
        out_shape=(jax.ShapeDtypeStruct((G, Mg * L, D), jnp.float32),
                   jax.ShapeDtypeStruct((G, Mg * L, P), jnp.float32)),
        compiler_params=pltpu.CompilerParams(
            dimension_semantics=("parallel", "parallel")),
    )(*args)
    return h.reshape(G, Mg, L, D), y.reshape(G, Mg, L, P)


# ----------------------------------------------------------------------------
# Glue (plain JAX)
# ----------------------------------------------------------------------------
def positional_encoding(x, table, index):
    # x: (B, N, T, D), index: (B, N, 1, T) integer indices into table (max_len, D)
    pe = table[index[:, :, 0, :]]            # gather (glue)
    return x + pe                            # dropout omitted (eval mode)


def unshuffle(shuffled_tokens):
    dic = {}
    for k, v in enumerate(shuffled_tokens):
        dic[v] = k
    unshuffle_index = []
    for i in range(len(shuffled_tokens)):
        unshuffle_index.append(dic[i])
    return unshuffle_index


# ----------------------------------------------------------------------------
# Parameter initialization (deterministic)
# ----------------------------------------------------------------------------
def _init_linear(key, fan_in, fan_out):
    kw, kb = jax.random.split(key)
    bound = 1.0 / math.sqrt(fan_in)
    w = jax.random.uniform(kw, (fan_in, fan_out), jnp.float32, -bound, bound)
    b = jax.random.uniform(kb, (fan_out,), jnp.float32, -bound, bound)
    return w, b


def _init_encoder_layer(key, D):
    ks = jax.random.split(key, 4)
    in_w, in_b = _init_linear(ks[0], D, 3 * D)
    out_w, out_b = _init_linear(ks[1], D, D)
    ff1_w, ff1_b = _init_linear(ks[2], D, 4 * D)
    ff2_w, ff2_b = _init_linear(ks[3], 4 * D, D)
    return dict(in_w=in_w, in_b=in_b, out_w=out_w, out_b=out_b,
                ff1_w=ff1_w, ff1_b=ff1_b, ff2_w=ff2_w, ff2_b=ff2_b,
                ln1_g=jnp.ones((D,), jnp.float32), ln1_b=jnp.zeros((D,), jnp.float32),
                ln2_g=jnp.ones((D,), jnp.float32), ln2_b=jnp.zeros((D,), jnp.float32))


def init_fepcross_params(key, cfg):
    P, D = cfg['patch_size'], cfg['out_channel']
    n_tokens = cfg['mask_size']
    n_layers = 2  # hard-coded L = 2 in FEPCross.__init__
    ks = jax.random.split(key, 20)
    p = {}
    p['patch_w'], p['patch_b'] = _init_linear(ks[0], P, D)   # Conv2d((P,1)) == per-patch linear
    p['pe_table'] = 0.02 * jax.random.normal(ks[1], (cfg['pe_max_len'], D), jnp.float32)
    p['embed_out_w'], p['embed_out_b'] = _init_linear(ks[2], D * n_tokens, 32)  # Linear(128*24, 32)
    p['enc'] = [_init_encoder_layer(k, D) for k in jax.random.split(ks[3], n_layers)]
    p['enc_a'] = [_init_encoder_layer(k, D) for k in jax.random.split(ks[4], n_layers)]
    p['enc_phi'] = [_init_encoder_layer(k, D) for k in jax.random.split(ks[5], n_layers)]
    p['dec'] = [_init_encoder_layer(k, D) for k in jax.random.split(ks[6], n_layers)]
    p['e2d_w'], p['e2d_b'] = _init_linear(ks[7], D, D)
    p['e2d_a_w'], p['e2d_a_b'] = _init_linear(ks[8], D, D)
    p['e2d_phi_w'], p['e2d_phi_b'] = _init_linear(ks[9], D, D)
    p['mask_token'] = jax.random.uniform(ks[10], (1, 1, 1, D), jnp.float32, -0.02, 0.02)
    p['mask_token_a'] = jax.random.uniform(ks[11], (1, 1, 1, D), jnp.float32, -0.02, 0.02)
    p['mask_token_phi'] = jax.random.uniform(ks[12], (1, 1, 1, D), jnp.float32, -0.02, 0.02)
    p['out_w'], p['out_b'] = _init_linear(ks[13], D, P)
    p['out_a_w'], p['out_a_b'] = _init_linear(ks[14], D, P)
    p['out_phi_w'], p['out_phi_b'] = _init_linear(ks[15], D, P)
    return p


# ----------------------------------------------------------------------------
# FEPCross forward (Pretrain mode, Contrastive=True)
# ----------------------------------------------------------------------------
def fepcross_forward_pretrain(params, cfg, inp, inp_a, inp_phi,
                              unmasked_token_index, masked_token_index):
    P, D = cfg['patch_size'], cfg['out_channel']
    B, N, C, L = inp.shape
    Lp = L // P

    # --- position channel -> PE indices (matches `position // 12` in the spec) ---
    position = inp[:, :, 1, :][:, :, None, :]                        # (B, N, 1, L)
    pos_indices = jnp.arange(0, L, P)
    position = position[:, :, :, pos_indices]                        # (B, N, 1, Lp)
    position = jnp.floor_divide(position, 12.0).astype(jnp.int32)

    # --- Patch embedding: shared Conv2d((P,1)) over all 3 modalities, ONE call ---
    def to_patches(x):
        return x[:, :, 0, :].reshape(B, N, Lp, P)
    raw = jnp.stack([to_patches(inp), to_patches(inp_a), to_patches(inp_phi)], axis=0)
    patches_all = grouped_linear(raw.reshape(1, 3 * B * N * Lp, P),
                                 params['patch_w'][None], params['patch_b'][None])
    patches_all = patches_all.reshape(3, B, N, Lp, D)
    patches, patches_a, patches_phi = patches_all[0], patches_all[1], patches_all[2]

    patches = positional_encoding(patches, params['pe_table'], position)

    um = jnp.asarray(unmasked_token_index, jnp.int32)
    mk = jnp.asarray(masked_token_index, jnp.int32)
    n_unmasked = len(unmasked_token_index)
    n_masked = len(masked_token_index)

    enc_in = patches[:, :, um, :]
    enc_in_a = patches_a[:, :, um, :]
    enc_in_phi = patches_phi[:, :, um, :]

    # --- three modality encoders + encoder_2_decoder: ONE fused call (G=3) ---
    enc_stack = jnp.stack([enc_in, enc_in_a, enc_in_phi], 0).reshape(
        3, B * N, n_unmasked, D)
    enc_layers = _stack_layer_params([params['enc'], params['enc_a'], params['enc_phi']])
    e2d_w = jnp.stack([params['e2d_w'], params['e2d_a_w'], params['e2d_phi_w']], 0)
    e2d_b = jnp.stack([params['e2d_b'], params['e2d_a_b'], params['e2d_phi_b']], 0)
    H_proj = fused_encoder(enc_stack, enc_layers, e2d_w, e2d_b)        # bf16
    H_proj = H_proj.reshape(3, B, N, n_unmasked, D)

    indices = jnp.broadcast_to(mk.reshape(1, 1, 1, n_masked), (B, N, 1, n_masked))

    def masked_stream(token):
        t = jnp.broadcast_to(token, (B, N, n_masked, D))
        return positional_encoding(t, params['pe_table'], indices).astype(jnp.bfloat16)

    H_full = jnp.concatenate([H_proj[0], masked_stream(params['mask_token'])], axis=-2)
    H_full_a = jnp.concatenate([H_proj[1], masked_stream(params['mask_token_a'])], axis=-2)
    H_full_phi = jnp.concatenate([H_proj[2], masked_stream(params['mask_token_phi'])], axis=-2)

    # TODO(synk): exact cross-modal decoder (TransformerLayers with Gconv) source is not
    # available; approximated as a shared-weight transformer applied per modality (Gconv=False).
    # Decoder + per-modality output_layer fused into ONE call; all 3 modalities batched.
    dec_in = jnp.stack([H_full, H_full_a, H_full_phi], 0).reshape(3, B * N, Lp, D)
    dec_layers = _stack_layer_params([params['dec']])
    out_w = jnp.stack([params['out_w'], params['out_a_w'], params['out_phi_w']], 0)
    out_b = jnp.stack([params['out_b'], params['out_a_b'], params['out_phi_b']], 0)
    Hd_stack, out_stack = fused_decoder(dec_in, dec_layers, out_w, out_b)
    Hd_stack = Hd_stack.reshape(3, B, N, Lp, D)                        # f32
    outs = out_stack.reshape(3, B, N, Lp, P)                           # f32
    out_full, out_full_a, out_full_phi = outs[0], outs[1], outs[2]

    # --- contrastive embedding head ---
    decoder_output = jnp.mean(Hd_stack, axis=0)                        # (B, N, Lp, D)
    decoder_output = decoder_output.reshape(1, B * N, Lp * D)
    decoder_output = grouped_linear(decoder_output, params['embed_out_w'][None],
                                    params['embed_out_b'][None])
    decoder_output = decoder_output.reshape(B, N, 32)

    def take_masked(out):
        o = out[:, :, n_unmasked:, :].reshape(B, N, -1)
        return jnp.transpose(o, (0, 2, 1))                             # (B, n_masked*P, N)

    out_masked_tokens = take_masked(out_full)
    out_masked_tokens_a = take_masked(out_full_a)
    out_masked_tokens_phi = take_masked(out_full_phi)

    def labels(x):  # permute/unfold/select/transpose == reshape of channel 0
        lf = x[:, :, 0, :].reshape(B, N, Lp, P)
        lm = lf[:, :, mk, :].reshape(B, N, -1)
        return lf, jnp.transpose(lm, (0, 2, 1))

    label_full, label_masked_tokens = labels(inp)
    _, label_masked_tokens_a = labels(inp_a)
    _, label_masked_tokens_phi = labels(inp_phi)

    unshuffled_index = jnp.asarray(
        unshuffle(list(unmasked_token_index) + list(masked_token_index)), jnp.int32)
    out_full_unshuffled = out_full[:, :, unshuffled_index, :]

    plot_args = {
        'out_full_unshuffled': out_full_unshuffled,
        'label_full': label_full,
        'unmasked_token_index': list(unmasked_token_index),
        'masked_token_index': list(masked_token_index),
    }

    return (out_masked_tokens, label_masked_tokens,
            out_masked_tokens_a, label_masked_tokens_a,
            out_masked_tokens_phi, label_masked_tokens_phi,
            plot_args, decoder_output)


# ----------------------------------------------------------------------------
if __name__ == "__main__":
    cfg = dict(patch_size=12, in_channel=1, out_channel=128, dropout=0.1,
               mask_size=24, mask_ratio=0.75, L=2, Gconv=False, Contrastive=True,
               pe_max_len=512)
    B, N = 2, 4
    P, Lp = cfg['patch_size'], cfg['mask_size']
    L = Lp * P  # 288

    key = jax.random.PRNGKey(0)
    k_par, k_in, k_a, k_phi = jax.random.split(key, 4)
    params = init_fepcross_params(k_par, cfg)

    speed = jax.random.normal(k_in, (B, N, L), jnp.float32)
    pos = jnp.broadcast_to(jnp.arange(L, dtype=jnp.float32), (B, N, L))
    inp = jnp.stack([speed, pos], axis=2)                              # (B, N, 2, L)
    inp_a = jax.random.normal(k_a, (B, N, 2, L), jnp.float32)
    inp_phi = jax.random.normal(k_phi, (B, N, 2, L), jnp.float32)

    # MaskGenerator (uniform random shuffle) made deterministic.
    rng = np.random.RandomState(0)
    perm = rng.permutation(cfg['mask_size']).tolist()
    n_masked = int(cfg['mask_size'] * cfg['mask_ratio'])
    masked_token_index = perm[:n_masked]
    unmasked_token_index = perm[n_masked:]

    outs = fepcross_forward_pretrain(params, cfg, inp, inp_a, inp_phi,
                                     unmasked_token_index, masked_token_index)

    jax.block_until_ready(outs[0])        # out_masked_tokens       (B, n_masked*P, N)
    jax.block_until_ready(outs[1])        # label_masked_tokens
    jax.block_until_ready(outs[-1])       # decoder_output          (B, N, 32)
    assert outs[0].shape == (B, n_masked * P, N)
    assert outs[2].shape == (B, n_masked * P, N)
    assert outs[4].shape == (B, n_masked * P, N)
    assert outs[-1].shape == (B, N, 32)
    print("KERNEL_OK")
</pallas_src>

<mosaic_0001>
module attributes {stable_mosaic.version = 11 : i64} {
  func.func @_grouped_linear_kernel(%arg0: i32, %arg1: i32, %arg2: memref<1x288x12xbf16, #tpu.memory_space<vmem>>, %arg3: memref<1x12x128xbf16, #tpu.memory_space<vmem>>, %arg4: memref<1x1x128xf32, #tpu.memory_space<vmem>>, %arg5: memref<1x288x128xf32, #tpu.memory_space<vmem>>) attributes {dimension_semantics = [#tpu.dimension_semantics<parallel>, #tpu.dimension_semantics<parallel>], iteration_bounds = array<i64: 1, 2>, scalar_prefetch = 0 : i64, scratch_operands = 0 : i64, tpu.core_type = #tpu.core_type<tc>, window_params = [{transform_indices = @transform_0, window_bounds = array<i64: 1, 288, 12>}, {transform_indices = @transform_1, window_bounds = array<i64: 1, 12, 128>}, {transform_indices = @transform_2, window_bounds = array<i64: 1, 1, 128>}, {transform_indices = @transform_3, window_bounds = array<i64: 1, 288, 128>}]} {
    %c0 = arith.constant 0 : index
    %c0_0 = arith.constant 0 : index
    %c0_1 = arith.constant 0 : index
    %0 = vector.load %arg2[%c0, %c0_0, %c0_1] : memref<1x288x12xbf16, #tpu.memory_space<vmem>>, vector<1x288x12xbf16>
    %1 = vector.shape_cast %0 : vector<1x288x12xbf16> to vector<288x12xbf16>
    %c0_2 = arith.constant 0 : index
    %c0_3 = arith.constant 0 : index
    %c0_4 = arith.constant 0 : index
    %2 = vector.load %arg3[%c0_2, %c0_3, %c0_4] : memref<1x12x128xbf16, #tpu.memory_space<vmem>>, vector<1x12x128xbf16>
    %3 = vector.shape_cast %2 : vector<1x12x128xbf16> to vector<12x128xbf16>
    %cst = arith.constant dense<0.000000e+00> : vector<288x128xf32>
    %4 = tpu.matmul %1, %3, %cst {dimension_numbers = #tpu.dot_dimension_numbers<[1], [0], [0], [1], [0, 0, 1, 1], [], []>} : vector<288x12xbf16>, vector<12x128xbf16>, vector<288x128xf32> -> vector<288x128xf32>
    %c0_5 = arith.constant 0 : index
    %c0_6 = arith.constant 0 : index
    %c0_7 = arith.constant 0 : index
    %5 = vector.load %arg4[%c0_5, %c0_6, %c0_7] : memref<1x1x128xf32, #tpu.memory_space<vmem>>, vector<1x1x128xf32>
    %6 = vector.shape_cast %5 : vector<1x1x128xf32> to vector<1x128xf32>
    %7 = vector.broadcast %6 : vector<1x128xf32> to vector<288x128xf32>
    %8 = arith.addf %4, %7 : vector<288x128xf32>
    %c0_8 = arith.constant 0 : index
    %c0_9 = arith.constant 0 : index
    %c0_10 = arith.constant 0 : index
    %9 = vector.load %arg5[%c0_8, %c0_9, %c0_10] : memref<1x288x128xf32, #tpu.memory_space<vmem>>, vector<1x288x128xf32>
    %10 = vector.shape_cast %9 : vector<1x288x128xf32> to vector<288x128xf32>
    %11 = vector.shape_cast %8 : vector<288x128xf32> to vector<1x288x128xf32>
    tpu.vector_store %arg5[%c0_8, %c0_9, %c0_10], %11 {strides = array<i32>} : memref<1x288x128xf32, #tpu.memory_space<vmem>>, vector<1x288x128xf32>,
    return
  }
  func.func @transform_0(%arg0: i32, %arg1: i32) -> (i32, i32, i32) {
    %c0_i32 = arith.constant 0 : i32
    %c0_i32_0 = arith.constant 0 : i32
    return %arg0, %arg1, %c0_i32 : i32, i32, i32
  }
  func.func @transform_1(%arg0: i32, %arg1: i32) -> (i32, i32, i32) {
    %c0_i32 = arith.constant 0 : i32
    %c0_i32_0 = arith.constant 0 : i32
    %c0_i32_1 = arith.constant 0 : i32
    return %arg0, %c0_i32, %c0_i32_0 : i32, i32, i32
  }
  func.func @transform_2(%arg0: i32, %arg1: i32) -> (i32, i32, i32) {
    %c0_i32 = arith.constant 0 : i32
    %c0_i32_0 = arith.constant 0 : i32
    %c0_i32_1 = arith.constant 0 : i32
    return %arg0, %c0_i32, %c0_i32_0 : i32, i32, i32
  }
  func.func @transform_3(%arg0: i32, %arg1: i32) -> (i32, i32, i32) {
    %c0_i32 = arith.constant 0 : i32
    %c0_i32_0 = arith.constant 0 : i32
    return %arg0, %arg1, %c0_i32 : i32, i32, i32
  }
}

</mosaic_0001>

<llo_original>
// kernel: tpu_custom_call.1
$region0: #{tpu_custom_call.1}
  #allocation0 [shape = 'u32[]', space=smem, size = 0x4, offset = 0x4, fixed_abs, tag = 'smem constant byte address 0x4 - core index']
  #allocation1 [shape = 'u32[72,128]{1,0:T(1,128)}', space=vmem, size = 0x9000, scoped, tag = 'internal scratch']
  %s0 = inlined_call_operand.vmem [shape: bf16[1,576,12], index: 0, kind: input, shape index: {}]
  %s1 = inlined_call_operand.vmem [shape: bf16[1,12,128], index: 1, kind: input, shape index: {}]
  %s2 = inlined_call_operand.vmem [shape: f32[1,1,128], index: 2, kind: input, shape index: {}]
  %s3 = inlined_call_operand.hbm [shape: f32[1,576,128], index: 3, kind: output, shape index: {}]
  %s4 = sld [smem:[#allocation0]]
  $region45: #{tpu_custom_call.1} parent=0
    _
  %s6 = ssub.s32 1, %s4
  %s7 = scalar_select 0, %s6, %s4
  $region1: #{tpu_custom_call.1} parent=0
    #allocation2 [shape = 'u8[294912]{0}', space=vmem, size = 0x48000, scoped, tag = 'output window, operand 0']
    #allocation3 [shape = 's32[2]{0}', space=sflag, size = 0x8, scoped, tag = 'scoped memory for tpu_custom_call.1']
    %8 = vsyncpa [#allocation3], 0
    %s9 = scalar_lea.sflag [#allocation3], 1
    %10 = vsyncpa %s9, 0
    loop: start=0, step=1, limit=4
    $region2: #{tpu_custom_call.1} parent=1 // loop_pre_header
      _
    $region3: #{tpu_custom_call.1} parent=1 // loop_header
      %s12 = sphi 0, %s16
      %p13 = scmp.ge.s32.totalorder %s12, 4
      %s19 = sphi 0, %s31
      %s20 = sphi 0, %s27
      %s21 = sphi 0, %s19
      %s22 = sphi 0, %s20
      %s23 = sphi 0, %s21
      %s24 = sphi 0, %s22
      %s36 = sphi 0, %s38
      %s39 = sphi 0, %s36
      %s40 = sphi 0, %s39
      %s56 = sphi 0, %s40
      %s62 = sphi 0, %s64
      %s65 = sphi 0, %s62
      %s66 = sphi 0, %s65
      %s82 = sphi 0, %s66
      %s88 = sphi 0, %s90
      %s91 = sphi 0, %s88
      %s92 = sphi 0, %s91
      %s108 = sphi 0, %s92
      %s116 = sphi 0, %s118
      %s119 = sphi 0, %s116
      %s120 = sphi 0, %s119
      %s136 = sphi 0, %s120
    $region4: #{tpu_custom_call.1} parent=1 // loop_header_branch
      %15 = sbr.rel (%p13) target = $region8
    $region5: #{tpu_custom_call.1} parent=1 // loop_body
      %s17 = ssub.s32 %s12, 1
      %s18 = ssub.s32 %s12, 2
      %s25 = sadd.s32 1, %s20
      %p26 = scmp.ge.s32.totalorder %s25, 2
      %s27 = scalar_select %p26, 0, %s25
      %s28 = sadd.s32 1, %s19
      %s29 = scalar_select %p26, %s28, %s19
      %p30 = scmp.ge.s32.totalorder %s29, 1
      %s31 = scalar_select %p30, 0, %s29
      %s32 = ssub.s32 %s19, %s31
      %s33 = ssub.s32 %s20, %s27
      %s34 = sor.u32 %s32, %s33
      %p35 = scmp.eq.s32.totalorder %s34, 0
      %s37 = sadd.s32 %s36, 1
      %s38 = scalar_select %p35, %s36, %s37
      %p41 = pneg %p35
      %p42 = scmp.eq.s32.totalorder %s12, 1
      %p43 = por %p41, %p42
      %p44 = scmp.ne.s32.totalorder %s36, %s39
      %p45 = scmp.eq.s32.totalorder %s12, 0
      %p46 = por %p44, %p45
      %p47 = scmp.ne.s32.totalorder %s36, %s39
      %p48 = scmp.eq.s32.totalorder %s17, 1
      %p49 = por %p47, %p48
      %p50 = scmp.ne.s32.totalorder %s39, %s40
      %p51 = scmp.eq.s32.totalorder %s17, 0
      %p52 = por %p50, %p51
      %p53 = scmp.ne.s32.totalorder %s39, %s40
      %p54 = scmp.eq.s32.totalorder %s18, 1
      %p55 = por %p53, %p54
      %p57 = scmp.ne.s32.totalorder %s40, %s56
      %p58 = scmp.eq.s32.totalorder %s18, 0
      %p59 = por %p57, %p58
      %s60 = ssub.s32 %s19, %s31
      %p61 = scmp.eq.s32.totalorder %s60, 0
      %s63 = sadd.s32 %s62, 1
      %s64 = scalar_select %p61, %s62, %s63
      %p67 = pneg %p61
      %p68 = scmp.eq.s32.totalorder %s12, 1
      %p69 = por %p67, %p68
      %p70 = scmp.ne.s32.totalorder %s62, %s65
      %p71 = scmp.eq.s32.totalorder %s12, 0
      %p72 = por %p70, %p71
      %p73 = scmp.ne.s32.totalorder %s62, %s65
      %p74 = scmp.eq.s32.totalorder %s17, 1
      %p75 = por %p73, %p74
      %p76 = scmp.ne.s32.totalorder %s65, %s66
      %p77 = scmp.eq.s32.totalorder %s17, 0
      %p78 = por %p76, %p77
      %p79 = scmp.ne.s32.totalorder %s65, %s66
      %p80 = scmp.eq.s32.totalorder %s18, 1
      %p81 = por %p79, %p80
      %p83 = scmp.ne.s32.totalorder %s66, %s82
      %p84 = scmp.eq.s32.totalorder %s18, 0
      %p85 = por %p83, %p84
      %s86 = ssub.s32 %s19, %s31
      %p87 = scmp.eq.s32.totalorder %s86, 0
      %s89 = sadd.s32 %s88, 1
      %s90 = scalar_select %p87, %s88, %s89
      %p93 = pneg %p87
      %p94 = scmp.eq.s32.totalorder %s12, 1
      %p95 = por %p93, %p94
      %p96 = scmp.ne.s32.totalorder %s88, %s91
      %p97 = scmp.eq.s32.totalorder %s12, 0
      %p98 = por %p96, %p97
      %p99 = scmp.ne.s32.totalorder %s88, %s91
      %p100 = scmp.eq.s32.totalorder %s17, 1
      %p101 = por %p99, %p100
      %p102 = scmp.ne.s32.totalorder %s91, %s92
      %p103 = scmp.eq.s32.totalorder %s17, 0
      %p104 = por %p102, %p103
      %p105 = scmp.ne.s32.totalorder %s91, %s92
      %p106 = scmp.eq.s32.totalorder %s18, 1
      %p107 = por %p105, %p106
      %p109 = scmp.ne.s32.totalorder %s92, %s108
      %p110 = scmp.eq.s32.totalorder %s18, 0
      %p111 = por %p109, %p110
      %s112 = ssub.s32 %s19, %s31
      %s113 = ssub.s32 %s20, %s27
      %s114 = sor.u32 %s112, %s113
      %p115 = scmp.eq.s32.totalorder %s114, 0
      %s117 = sadd.s32 %s116, 1
      %s118 = scalar_select %p115, %s116, %s117
      %p121 = pneg %p115
      %p122 = scmp.eq.s32.totalorder %s12, 1
      %p123 = por %p121, %p122
      %p124 = scmp.ne.s32.totalorder %s116, %s119
      %p125 = scmp.eq.s32.totalorder %s12, 0
      %p126 = por %p124, %p125
      %p127 = scmp.ne.s32.totalorder %s116, %s119
      %p128 = scmp.eq.s32.totalorder %s17, 1
      %p129 = por %p127, %p128
      %p130 = scmp.ne.s32.totalorder %s119, %s120
      %p131 = scmp.eq.s32.totalorder %s17, 0
      %p132 = por %p130, %p131
      %p133 = scmp.ne.s32.totalorder %s119, %s120
      %p134 = scmp.eq.s32.totalorder %s18, 1
      %p135 = por %p133, %p134
      %p137 = scmp.ne.s32.totalorder %s120, %s136
      %p138 = scmp.eq.s32.totalorder %s18, 0
      %p139 = por %p137, %p138
      %p140 = scmp.le.s32.totalorder 1, %s12
      %p141 = scmp.lt.s32.totalorder %s12, 3
      %p142 = pnand %p140, %p141
      %p143 = pneg %p142
      // Predicated region
      $region9: #{tpu_custom_call.1} parent=5 // pred_check
        _
      $region10: #{tpu_custom_call.1} parent=5 // pred_check_branch
        %145 = sbr.rel (%p142) target = $region12
      $region11: #{tpu_custom_call.1} parent=5 // pred_region
        %s146 = ssub.s32 %s12, 1
        // Predicated region
        $region13: #{tpu_custom_call.1} parent=11 // pred_check
          %p147 = pneg %p78
        $region14: #{tpu_custom_call.1} parent=11 // pred_check_branch
          %149 = sbr.rel (%p147) target = $region16
        $region15: #{tpu_custom_call.1} parent=11 // pred_region
          %p150 = scmp.lt.s32.totalorder %s21, 0
          %s151 = scalar_select %p150, %s21, 0
          %s152 = smul.addr %s151, 2
          %s153 = smul.addr %s152, 4
          %s154 = scalar_lea.vmem %s1, %s153
        $region16: #{tpu_custom_call.1} parent=11 // pred_fallthru
          _
        // Predicated region
        $region17: #{tpu_custom_call.1} parent=11 // pred_check
          %p155 = pneg %p104
        $region18: #{tpu_custom_call.1} parent=11 // pred_check_branch
          %157 = sbr.rel (%p155) target = $region20
        $region19: #{tpu_custom_call.1} parent=11 // pred_region
          %p158 = scmp.lt.s32.totalorder %s21, 0
          %s159 = scalar_select %p158, %s21, 0
          %s160 = scalar_lea.vmem %s2, %s159
        $region20: #{tpu_custom_call.1} parent=11 // pred_fallthru
          _
      $region12: #{tpu_custom_call.1} parent=5 // pred_fallthru
        _
      %p161 = scmp.lt.s32.totalorder %s12, 2
      // Predicated region
      $region21: #{tpu_custom_call.1} parent=5 // pred_check
        %p162 = pneg %p161
      $region22: #{tpu_custom_call.1} parent=5 // pred_check_branch
        %164 = sbr.rel (%p162) target = $region24
      $region23: #{tpu_custom_call.1} parent=5 // pred_region
        // Predicated region
        $region25: #{tpu_custom_call.1} parent=23 // pred_check
          %p165 = pneg %p46
        $region26: #{tpu_custom_call.1} parent=23 // pred_check_branch
          %167 = sbr.rel (%p165) target = $region28
        $region27: #{tpu_custom_call.1} parent=23 // pred_region
          %s168 = smul.u32 36, %s20
          %p169 = scmp.lt.s32.totalorder %s19, 0
          %s170 = scalar_select %p169, %s19, 0
          %p171 = scmp.lt.s32.totalorder %s168, 71
          %s172 = scalar_select %p171, %s168, 71
          %s173 = smul.addr %s170, 72
          %s174 = sadd.s32 %s172, %s173
          %s175 = smul.addr %s174, 4
          %s176 = scalar_lea.vmem %s0, %s175
          %s177 = smul.u32 36, %s20
        $region28: #{tpu_custom_call.1} parent=23 // pred_fallthru
          _
      $region24: #{tpu_custom_call.1} parent=5 // pred_fallthru
        _
      %p178 = scmp.le.s32.totalorder 1, %s12
      %p179 = scmp.lt.s32.totalorder %s12, 3
      %p180 = pnand %p178, %p179
      %p181 = pneg %p180
      // Predicated region
      $region29: #{tpu_custom_call.1} parent=5 // pred_check
        _
      $region30: #{tpu_custom_call.1} parent=5 // pred_check_branch
        %183 = sbr.rel (%p180) target = $region32
      $region31: #{tpu_custom_call.1} parent=5 // pred_region
        %s184 = ssub.s32 %s12, 1
        %s185 = smul.u32 36, %s22
        %p186 = scmp.lt.s32.totalorder %s21, 0
        %s187 = scalar_select %p186, %s21, 0
        %p188 = scmp.lt.s32.totalorder %s185, 71
        %s189 = scalar_select %p188, %s185, 71
        %s190 = smul.addr %s187, 72
        %s191 = sadd.s32 %s189, %s190
        %s192 = smul.addr %s191, 4
        %s193 = scalar_lea.vmem %s0, %s192
        %p194 = pneg %p52
        %p195 = pneg %p49
        %p196 = scmp.lt.s32.totalorder %s21, 0
        %s197 = scalar_select %p196, %s21, 0
        %s198 = smul.addr %s197, 2
        %s199 = smul.addr %s198, 4
        %s200 = scalar_lea.vmem %s1, %s199
        %p201 = pneg %p78
        %p202 = pneg %p75
        %p203 = scmp.lt.s32.totalorder %s21, 0
        %s204 = scalar_select %p203, %s21, 0
        %s205 = scalar_lea.vmem %s2, %s204
        %p206 = pneg %p104
        %p207 = pneg %p101
        %p208 = pneg %p132
        %p209 = pneg %p129
        %s210 = sand.u32 %s119, 1
        %s211 = scalar_lea.sflag [#allocation3], %s210
        %s212 = sand.u32 %s119, 1
        %s213 = smul.addr %s212, 288
        %s214 = scalar_lea.vmem [#allocation2], %s213
        %s215 = smul.u32 36, %s22
        %p216 = scmp.lt.s32.totalorder %s21, 0
        %s217 = scalar_select %p216, %s21, 0
        %p218 = scmp.lt.s32.totalorder %s215, 71
        %s219 = scalar_select %p218, %s215, 71
        %s220 = smul.addr %s217, 72
        %s221 = sadd.s32 %s219, %s220
        %s222 = smul.addr %s221, 4
        %s223 = scalar_lea.vmem %s0, %s222
        %s224 = smul.u32 36, %s22
        %p225 = scmp.lt.s32.totalorder %s21, 0
        %s226 = scalar_select %p225, %s21, 0
        %s227 = smul.addr %s226, 2
        %s228 = smul.addr %s227, 4
        %s229 = scalar_lea.vmem %s1, %s228
        %p230 = scmp.lt.s32.totalorder %s21, 0
        %s231 = scalar_select %p230, %s21, 0
        %s232 = scalar_lea.vmem %s2, %s231
        %s233 = smul.u32 36, %s22
        %v235 = vld [vmem:[%s223] sm:$0xf]
        %v236 = vld [vmem:[%s223 + $0x4] sm:$0xf]
        %v237 = vld [vmem:[%s223 + $0x8] sm:$0xf]
        %v238 = vld [vmem:[%s223 + $0xc] sm:$0xf]
        %v239 = vld [vmem:[%s223 + $0x10] sm:$0xf]
        %v240 = vld [vmem:[%s223 + $0x14] sm:$0xf]
        %v241 = vld [vmem:[%s223 + $0x18] sm:$0xf]
        %v242 = vld [vmem:[%s223 + $0x1c] sm:$0xf]
        %v243 = vld [vmem:[%s223 + $0x20] sm:$0xf]
        %v244 = vld [vmem:[%s223 + $0x24] sm:$0xf]
        %v245 = vld [vmem:[%s223 + $0x28] sm:$0xf]
        %v246 = vld [vmem:[%s223 + $0x2c] sm:$0xf]
        %v247 = vld [vmem:[%s223 + $0x30] sm:$0xf]
        %v248 = vld [vmem:[%s223 + $0x34] sm:$0xf]
        %v249 = vld [vmem:[%s223 + $0x38] sm:$0xf]
        %v250 = vld [vmem:[%s223 + $0x3c] sm:$0xf]
        %v251 = vld [vmem:[%s223 + $0x40] sm:$0xf]
        %v252 = vld [vmem:[%s223 + $0x44] sm:$0xf]
        %v253 = vld [vmem:[%s223 + $0x48] sm:$0xf]
        %v254 = vld [vmem:[%s223 + $0x4c] sm:$0xf]
        %v255 = vld [vmem:[%s223 + $0x50] sm:$0xf]
        %v256 = vld [vmem:[%s223 + $0x54] sm:$0xf]
        %v257 = vld [vmem:[%s223 + $0x58] sm:$0xf]
        %v258 = vld [vmem:[%s223 + $0x5c] sm:$0xf]
        %v259 = vld [vmem:[%s223 + $0x60] sm:$0xf]
        %v260 = vld [vmem:[%s223 + $0x64] sm:$0xf]
        %v261 = vld [vmem:[%s223 + $0x68] sm:$0xf]
        %v262 = vld [vmem:[%s223 + $0x6c] sm:$0xf]
        %v263 = vld [vmem:[%s223 + $0x70] sm:$0xf]
        %v264 = vld [vmem:[%s223 + $0x74] sm:$0xf]
        %v265 = vld [vmem:[%s223 + $0x78] sm:$0xf]
        %v266 = vld [vmem:[%s223 + $0x7c] sm:$0xf]
        %v267 = vld [vmem:[%s223 + $0x80] sm:$0xf]
        %v268 = vld [vmem:[%s223 + $0x84] sm:$0xf]
        %v269 = vld [vmem:[%s223 + $0x88] sm:$0xf]
        %v270 = vld [vmem:[%s223 + $0x8c] sm:$0xf]
        %v271 = vld [vmem:[%s229] sm:$0xf]
        %v272 = vld [vmem:[%s229 + $0x4] sm:$0x3]
        %v273 = vld [vmem:[%s232] sm:$0x1]
        %v275 = vperm.slane %v273, 0
        %v313 = vunpack.c.l.b16 %v235
        %v314 = vunpack.c.l.b16 %v236
        %v315 = vunpack.c.l.b16 %v237
        %v316 = vunpack.c.l.b16 %v238
        %v317 = vunpack.c.l.b16 %v239
        %v318 = vunpack.c.l.b16 %v240
        %v319 = vunpack.c.l.b16 %v241
        %v320 = vunpack.c.l.b16 %v242
        %v321 = vunpack.c.l.b16 %v243
        %v322 = vunpack.c.l.b16 %v244
        %v323 = vunpack.c.l.b16 %v245
        %v324 = vunpack.c.l.b16 %v246
        %v325 = vunpack.c.l.b16 %v247
        %v326 = vunpack.c.l.b16 %v248
        %v327 = vunpack.c.l.b16 %v249
        %v328 = vunpack.c.l.b16 %v250
        %v329 = vunpack.c.l.b16 %v251
        %v330 = vunpack.c.l.b16 %v252
        %v331 = vunpack.c.l.b16 %v253
        %v332 = vunpack.c.l.b16 %v254
        %v333 = vunpack.c.l.b16 %v255
        %v334 = vunpack.c.l.b16 %v256
        %v335 = vunpack.c.l.b16 %v257
        %v336 = vunpack.c.l.b16 %v258
        %v337 = vunpack.c.l.b16 %v259
        %v338 = vunpack.c.l.b16 %v260
        %v339 = vunpack.c.l.b16 %v261
        %v340 = vunpack.c.l.b16 %v262
        %v341 = vunpack.c.l.b16 %v263
        %v342 = vunpack.c.l.b16 %v264
        %v343 = vunpack.c.l.b16 %v265
        %v344 = vunpack.c.l.b16 %v266
        %v345 = vunpack.c.l.b16 %v267
        %v346 = vunpack.c.l.b16 %v268
        %v347 = vunpack.c.l.b16 %v269
        %v348 = vunpack.c.l.b16 %v270
        %v349 = vpack.c.b16 %v314, %v313
        %v350 = vpack.c.b16 %v316, %v315
        %v351 = vpack.c.b16 %v318, %v317
        %v352 = vpack.c.b16 %v320, %v319
        %v353 = vpack.c.b16 %v322, %v321
        %v354 = vpack.c.b16 %v324, %v323
        %v355 = vpack.c.b16 %v326, %v325
        %v356 = vpack.c.b16 %v328, %v327
        %v357 = vpack.c.b16 %v330, %v329
        %v358 = vpack.c.b16 %v332, %v331
        %v359 = vpack.c.b16 %v334, %v333
        %v360 = vpack.c.b16 %v336, %v335
        %v361 = vpack.c.b16 %v338, %v337
        %v362 = vpack.c.b16 %v340, %v339
        %v363 = vpack.c.b16 %v342, %v341
        %v364 = vpack.c.b16 %v344, %v343
        %v365 = vpack.c.b16 %v346, %v345
        %v366 = vpack.c.b16 %v348, %v347
        %v369 = vunpack.c.l.b16 %v271
        %v370 = vunpack.c.l.b16 %v272
        %v371 = vpack.c.b16 %v370, %v369
        %vm372 = vcmask 97280
        %v374 = vsel %vm372, %v349, 0
        %v377 = vsel %vm372, %v350, 0
        %v380 = vsel %vm372, %v351, 0
        %v383 = vsel %vm372, %v352, 0
        %v386 = vsel %vm372, %v353, 0
        %v389 = vsel %vm372, %v354, 0
        %v392 = vsel %vm372, %v355, 0
        %v395 = vsel %vm372, %v356, 0
        %v398 = vsel %vm372, %v357, 0
        %v401 = vsel %vm372, %v358, 0
        %v404 = vsel %vm372, %v359, 0
        %v407 = vsel %vm372, %v360, 0
        %v410 = vsel %vm372, %v361, 0
        %v413 = vsel %vm372, %v362, 0
        %v416 = vsel %vm372, %v363, 0
        %v419 = vsel %vm372, %v364, 0
        %v422 = vsel %vm372, %v365, 0
        %v425 = vsel %vm372, %v366, 0
        %vm427 = vcmask 1045504
        %v429 = vsel %vm427, %v371, 0
        %431 = vmatpush.bf16.msra.mxu0 0
        %432 = vmatpush.bf16.msra.mxu0 0
        %433 = vmatpush.bf16.msra.mxu0 0
        %434 = vmatpush.bf16.msra.mxu0 0
        %435 = vmatpush.bf16.msra.mxu0 0
        %436 = vmatpush.bf16.msra.mxu0 0
        %437 = vmatpush.bf16.msra.mxu0 0
        %438 = vmatpush.bf16.msra.mxu0 %v429
        %439 = vmatmul.bf16.gmra.mxu0 %v374
        %v440 = vpop.f32.mrf.mxu0
        %v441 = vadd.f32 %v275, %v440
        %v442 = vpop.f32.mrf.mxu0
        %v443 = vadd.f32 %v275, %v442
        %444 = vmatmul.bf16.gmra.mxu0 %v377
        %v445 = vpop.f32.mrf.mxu0
        %v446 = vadd.f32 %v275, %v445
        %v447 = vpop.f32.mrf.mxu0
        %v448 = vadd.f32 %v275, %v447
        %449 = vmatmul.bf16.gmra.mxu0 %v380
        %v450 = vpop.f32.mrf.mxu0
        %v451 = vadd.f32 %v275, %v450
        %v452 = vpop.f32.mrf.mxu0
        %v453 = vadd.f32 %v275, %v452
        %454 = vmatmul.bf16.gmra.mxu0 %v383
        %v455 = vpop.f32.mrf.mxu0
        %v456 = vadd.f32 %v275, %v455
        %v457 = vpop.f32.mrf.mxu0
        %v458 = vadd.f32 %v275, %v457
        %459 = vmatmul.bf16.gmra.mxu0 %v386
        %v460 = vpop.f32.mrf.mxu0
        %v461 = vadd.f32 %v275, %v460
        %v462 = vpop.f32.mrf.mxu0
        %v463 = vadd.f32 %v275, %v462
        %464 = vmatmul.bf16.gmra.mxu0 %v389
        %v465 = vpop.f32.mrf.mxu0
        %v466 = vadd.f32 %v275, %v465
        %v467 = vpop.f32.mrf.mxu0
        %v468 = vadd.f32 %v275, %v467
        %469 = vmatmul.bf16.gmra.mxu0 %v392
        %v470 = vpop.f32.mrf.mxu0
        %v471 = vadd.f32 %v275, %v470
        %v472 = vpop.f32.mrf.mxu0
        %v473 = vadd.f32 %v275, %v472
        %474 = vmatmul.bf16.gmra.mxu0 %v395
        %v475 = vpop.f32.mrf.mxu0
        %v476 = vadd.f32 %v275, %v475
        %v477 = vpop.f32.mrf.mxu0
        %v478 = vadd.f32 %v275, %v477
        %479 = vmatmul.bf16.gmra.mxu0 %v398
        %v480 = vpop.f32.mrf.mxu0
        %v481 = vadd.f32 %v275, %v480
        %v482 = vpop.f32.mrf.mxu0
        %v483 = vadd.f32 %v275, %v482
        %484 = vmatmul.bf16.gmra.mxu0 %v401
        %v485 = vpop.f32.mrf.mxu0
        %v486 = vadd.f32 %v275, %v485
        %v487 = vpop.f32.mrf.mxu0
        %v488 = vadd.f32 %v275, %v487
        %489 = vmatmul.bf16.gmra.mxu0 %v404
        %v490 = vpop.f32.mrf.mxu0
        %v491 = vadd.f32 %v275, %v490
        %v492 = vpop.f32.mrf.mxu0
        %v493 = vadd.f32 %v275, %v492
        %494 = vmatmul.bf16.gmra.mxu0 %v407
        %v495 = vpop.f32.mrf.mxu0
        %v496 = vadd.f32 %v275, %v495
        %v497 = vpop.f32.mrf.mxu0
        %v498 = vadd.f32 %v275, %v497
        %499 = vmatmul.bf16.gmra.mxu0 %v410
        %v500 = vpop.f32.mrf.mxu0
        %v501 = vadd.f32 %v275, %v500
        %v502 = vpop.f32.mrf.mxu0
        %v503 = vadd.f32 %v275, %v502
        %504 = vmatmul.bf16.gmra.mxu0 %v413
        %v505 = vpop.f32.mrf.mxu0
        %v506 = vadd.f32 %v275, %v505
        %v507 = vpop.f32.mrf.mxu0
        %v508 = vadd.f32 %v275, %v507
        %509 = vmatmul.bf16.gmra.mxu0 %v416
        %v510 = vpop.f32.mrf.mxu0
        %v511 = vadd.f32 %v275, %v510
        %v512 = vpop.f32.mrf.mxu0
        %v513 = vadd.f32 %v275, %v512
        %514 = vmatmul.bf16.gmra.mxu0 %v419
        %v515 = vpop.f32.mrf.mxu0
        %v516 = vadd.f32 %v275, %v515
        %v517 = vpop.f32.mrf.mxu0
        %v518 = vadd.f32 %v275, %v517
        %519 = vmatmul.bf16.gmra.mxu0 %v422
        %v520 = vpop.f32.mrf.mxu0
        %v521 = vadd.f32 %v275, %v520
        %v522 = vpop.f32.mrf.mxu0
        %v523 = vadd.f32 %v275, %v522
        %524 = vmatmul.bf16.gmra.mxu0 %v425
        %v525 = vpop.f32.mrf.mxu0
        %v526 = vadd.f32 %v275, %v525
        %v527 = vpop.f32.mrf.mxu0
        %v528 = vadd.f32 %v275, %v527
        %529 = vdwg.mxu0
        %530 = vst [vmem:[%s214] sm:$0xff] %v441
        %531 = vst [vmem:[%s214 + $0x8] sm:$0xff] %v443
        %532 = vst [vmem:[%s214 + $0x10] sm:$0xff] %v446
        %533 = vst [vmem:[%s214 + $0x18] sm:$0xff] %v448
        %534 = vst [vmem:[%s214 + $0x20] sm:$0xff] %v451
        %535 = vst [vmem:[%s214 + $0x28] sm:$0xff] %v453
        %536 = vst [vmem:[%s214 + $0x30] sm:$0xff] %v456
        %537 = vst [vmem:[%s214 + $0x38] sm:$0xff] %v458
        %538 = vst [vmem:[%s214 + $0x40] sm:$0xff] %v461
        %539 = vst [vmem:[%s214 + $0x48] sm:$0xff] %v463
        %540 = vst [vmem:[%s214 + $0x50] sm:$0xff] %v466
        %541 = vst [vmem:[%s214 + $0x58] sm:$0xff] %v468
        %542 = vst [vmem:[%s214 + $0x60] sm:$0xff] %v471
        %543 = vst [vmem:[%s214 + $0x68] sm:$0xff] %v473
        %544 = vst [vmem:[%s214 + $0x70] sm:$0xff] %v476
        %545 = vst [vmem:[%s214 + $0x78] sm:$0xff] %v478
        %546 = vst [vmem:[%s214 + $0x80] sm:$0xff] %v481
        %547 = vst [vmem:[%s214 + $0x88] sm:$0xff] %v483
        %548 = vst [vmem:[%s214 + $0x90] sm:$0xff] %v486
        %549 = vst [vmem:[%s214 + $0x98] sm:$0xff] %v488
        %550 = vst [vmem:[%s214 + $0xa0] sm:$0xff] %v491
        %551 = vst [vmem:[%s214 + $0xa8] sm:$0xff] %v493
        %552 = vst [vmem:[%s214 + $0xb0] sm:$0xff] %v496
        %553 = vst [vmem:[%s214 + $0xb8] sm:$0xff] %v498
        %554 = vst [vmem:[%s214 + $0xc0] sm:$0xff] %v501
        %555 = vst [vmem:[%s214 + $0xc8] sm:$0xff] %v503
        %556 = vst [vmem:[%s214 + $0xd0] sm:$0xff] %v506
        %557 = vst [vmem:[%s214 + $0xd8] sm:$0xff] %v508
        %558 = vst [vmem:[%s214 + $0xe0] sm:$0xff] %v511
        %559 = vst [vmem:[%s214 + $0xe8] sm:$0xff] %v513
        %560 = vst [vmem:[%s214 + $0xf0] sm:$0xff] %v516
        %561 = vst [vmem:[%s214 + $0xf8] sm:$0xff] %v518
        %562 = vst [vmem:[%s214 + $0x100] sm:$0xff] %v521
        %563 = vst [vmem:[%s214 + $0x108] sm:$0xff] %v523
        %564 = vst [vmem:[%s214 + $0x110] sm:$0xff] %v526
        %565 = vst [vmem:[%s214 + $0x118] sm:$0xff] %v528
        %s566 = sand.u32 %s119, 1
        %s567 = scalar_lea.sflag [#allocation3], %s566
        %s568 = sand.u32 %s119, 1
        %s569 = smul.addr %s568, 288
        %s570 = scalar_lea.vmem [#allocation2], %s569
        // Predicated region
        $region33: #{tpu_custom_call.1} parent=31 // pred_check
          %p571 = pneg %p129
        $region34: #{tpu_custom_call.1} parent=31 // pred_check_branch
          %573 = sbr.rel (%p571) target = $region36
        $region35: #{tpu_custom_call.1} parent=31 // pred_region
          %s574 = smul.u32 36, %s22
          %576 = vsyncadd %s567, 0
          %s577 = smul.addr %s21, 72
          %s578 = sadd.s32 %s574, %s577
          %s579 = smul.addr %s578, 8
          %s580 = scalar_lea.hbm %s3, %s579
          %s581 = sshll.u32 %s570, 4
          %s582 = int_to_ptr.vmem [resolvable:$true] %s581
          %s583 = sshll.u32 %s580, 4
          %s584 = int_to_ptr.hbm [resolvable:$true] %s583
          %589 = dma.vmem_to_hbm [thread:$0]  %s582, 4608, %s584, %s567, 128, 128, 8
        $region36: #{tpu_custom_call.1} parent=31 // pred_fallthru
          _
      $region32: #{tpu_custom_call.1} parent=5 // pred_fallthru
        _
      %p590 = scmp.le.s32.totalorder 2, %s12
      // Predicated region
      $region37: #{tpu_custom_call.1} parent=5 // pred_check
        %p591 = pneg %p590
      $region38: #{tpu_custom_call.1} parent=5 // pred_check_branch
        %593 = sbr.rel (%p591) target = $region40
      $region39: #{tpu_custom_call.1} parent=5 // pred_region
        %s594 = ssub.s32 %s12, 2
        // Predicated region
        $region41: #{tpu_custom_call.1} parent=39 // pred_check
          %p595 = pneg %p135
        $region42: #{tpu_custom_call.1} parent=39 // pred_check_branch
          %597 = sbr.rel (%p595) target = $region44
        $region43: #{tpu_custom_call.1} parent=39 // pred_region
          %s598 = sand.u32 %s120, 1
          %s599 = scalar_lea.sflag [#allocation3], %s598
          %s600 = sand.u32 %s120, 1
          %s601 = smul.addr %s600, 288
          %s602 = scalar_lea.vmem [#allocation2], %s601
          %604 = dma.done %s599, 4608
        $region44: #{tpu_custom_call.1} parent=39 // pred_fallthru
          _
      $region40: #{tpu_custom_call.1} parent=5 // pred_fallthru
        _
    $region6: #{tpu_custom_call.1} parent=1 // loop_footer
      %s16 = sadd.s32 1, %s12
    $region7: #{tpu_custom_call.1} parent=1 // loop_footer_branch
      %11 = sbr.rel target = $region3
    $region8: #{tpu_custom_call.1} parent=1 // loop_exit
      _
    %605 = vsyncpa [#allocation3], 1
    %s606 = scalar_lea.sflag [#allocation3], 1
    %607 = vsyncpa %s606, 1

</llo_original>
